<compile_context>
chip_gen: v5e
topology: v5e:2x2
jax: 0.10.0
libtpu: 0.0.40
codegen_flags: <defaults>
</compile_context>

<pallas_src>
import jax
import jax.numpy as jnp
import numpy as np
from jax import lax
from jax.experimental import pallas as pl
from jax.experimental.pallas import tpu as pltpu


def _gram_kernel(x_ref, g_ref):
    """Accumulate G += X_tile @ X_tile^T into the resident (C, C) output block."""
    @pl.when(pl.program_id(1) == 0)
    def _():
        g_ref[...] = jnp.zeros_like(g_ref)

    xt = x_ref[...].astype(jnp.float32)                       # (C, Ts)
    g_ref[...] += lax.dot_general(                            # X_tile @ X_tile^T
        xt, xt, (((1,), (1,)), ((), ())),
        preferred_element_type=jnp.float32)                   # (C, C)


def _apply_kernel(gamma_ref, g_ref, x_ref, o_ref, p_ref):
    """Per S tile: out = gamma * softmax(rowmax(G@G) - G@G) @ X_tile + X_tile."""
    @pl.when(pl.program_id(1) == 0)
    def _():
        g = g_ref[...]                                                  # (C, C)
        a = jnp.dot(g, g, preferred_element_type=jnp.float32)          # affinity
        a = jnp.max(a, axis=-1, keepdims=True) - a                     # affinity_new
        a = a - jnp.max(a, axis=-1, keepdims=True)                     # stable softmax
        e = jnp.exp(a)
        p_ref[...] = e / jnp.sum(e, axis=-1, keepdims=True)

    xt = x_ref[...].astype(jnp.float32)                                # (C, Ts)
    w = jnp.dot(p_ref[...], xt, preferred_element_type=jnp.float32)    # (C, Ts)
    o_ref[...] = (gamma_ref[0] * w + xt).astype(o_ref.dtype)


def _pick_s_tile(s, cap=2048):
    """Largest lane-dense tile (multiple of 128, <= cap) dividing S, else S."""
    if s <= cap:
        return s
    t = cap - (cap % 128)
    while t >= 128:
        if s % t == 0:
            return t
        t -= 128
    return s


def channel_attention_block_3d(x, gamma, *, s_tile=None):
    """x: (B, C, H, W, D) float32; gamma: scalar float. Returns same shape/dtype."""
    B, C, H, W, D = x.shape
    S = H * W * D
    if s_tile is None:
        s_tile = _pick_s_tile(S)
    assert S % s_tile == 0 and (s_tile == S or s_tile % 128 == 0)
    n_s = S // s_tile

    xs = x.reshape(B, C, S)                      # view-like reshape (row major)
    gamma = jnp.asarray(gamma, jnp.float32).reshape(1)

    # Pass 1: per-batch Gram matrix G = X @ X^T, accumulated over S tiles.
    gram = pl.pallas_call(
        _gram_kernel,
        out_shape=jax.ShapeDtypeStruct((B, C, C), jnp.float32),
        grid=(B, n_s),
        in_specs=[pl.BlockSpec((None, C, s_tile), lambda b, k: (b, 0, k))],
        out_specs=pl.BlockSpec((None, C, C), lambda b, k: (b, 0, 0)),
        compiler_params=pltpu.CompilerParams(
            dimension_semantics=("parallel", "arbitrary")),
    )(xs)

    # Pass 2: affinity / softmax once per batch, then gated output per S tile.
    out = pl.pallas_call(
        _apply_kernel,
        out_shape=jax.ShapeDtypeStruct((B, C, S), x.dtype),
        grid=(B, n_s),
        in_specs=[
            pl.BlockSpec(memory_space=pltpu.MemorySpace.SMEM),           # gamma
            pl.BlockSpec((None, C, C), lambda b, k: (b, 0, 0)),          # G
            pl.BlockSpec((None, C, s_tile), lambda b, k: (b, 0, k)),     # X tile
        ],
        out_specs=pl.BlockSpec((None, C, s_tile), lambda b, k: (b, 0, k)),
        scratch_shapes=[pltpu.VMEM((C, C), jnp.float32)],                # P
        compiler_params=pltpu.CompilerParams(
            dimension_semantics=("parallel", "arbitrary")),
    )(gamma, gram, xs)

    return out.reshape(B, C, H, W, D)


def _reference(x, gamma):
    """Pure-JAX reference mirroring the PyTorch forward."""
    B, C, H, W, D = x.shape
    xf = x.reshape(B, C, -1).astype(jnp.float32)
    hp = lax.Precision.HIGHEST
    aff1 = jnp.einsum('bcs,bds->bcd', xf, xf, precision=hp)   # X @ X^T (== affinity2)
    aff = jnp.einsum('bcd,bde->bce', aff1, aff1, precision=hp)
    aff_new = jnp.max(aff, axis=-1, keepdims=True) - aff
    aff_new = jax.nn.softmax(aff_new, axis=-1)
    w = jnp.einsum('bcd,bds->bcs', aff_new, xf, precision=hp)
    return (gamma * w + xf).reshape(x.shape).astype(x.dtype)


if __name__ == "__main__":
    key = jax.random.PRNGKey(0)
    # Small shapes consistent with the module: (B, C, H, W, D), S = 512.
    B, C, H, W, D = 2, 128, 8, 8, 8
    x = 0.05 * jax.random.normal(key, (B, C, H, W, D), jnp.float32)

    # nn.Parameter(torch.zeros(1)) initializes gamma to 0 (out == x); use a
    # nonzero gamma so the test actually exercises the attention math.
    gamma = 2.0

    # s_tile=256 -> two S tiles per batch, exercising the tiled accumulation.
    out = jax.block_until_ready(channel_attention_block_3d(x, gamma, s_tile=256))
    assert out.shape == x.shape and out.dtype == x.dtype

    ref = jax.block_until_ready(_reference(x, gamma))
    np.testing.assert_allclose(np.asarray(out), np.asarray(ref),
                               atol=2e-3, rtol=2e-3)
    print("KERNEL_OK")
</pallas_src>

<mosaic_0001>
module attributes {stable_mosaic.version = 11 : i64} {
  func.func @_gram_kernel(%arg0: i32, %arg1: i32, %arg2: memref<1x128x256xf32, #tpu.memory_space<vmem>>, %arg3: memref<1x128x128xf32, #tpu.memory_space<vmem>>) attributes {dimension_semantics = [#tpu.dimension_semantics<parallel>, #tpu.dimension_semantics<arbitrary>], iteration_bounds = array<i64: 2, 2>, scalar_prefetch = 0 : i64, scratch_operands = 0 : i64, tpu.core_type = #tpu.core_type<tc>, window_params = [{transform_indices = @transform_0, window_bounds = array<i64: 1, 128, 256>}, {transform_indices = @transform_1, window_bounds = array<i64: 1, 128, 128>}]} {
    %c0_i32 = arith.constant 0 : i32
    %0 = arith.cmpi eq, %arg1, %c0_i32 : i32
    %1 = arith.extui %0 : i1 to i32
    %c0_i32_0 = arith.constant 0 : i32
    %2 = arith.cmpi ne, %1, %c0_i32_0 : i32
    scf.if %2 {
      %cst_9 = arith.constant 0.000000e+00 : f32
      %12 = vector.broadcast %cst_9 : f32 to vector<128x128xf32>
      %c0_10 = arith.constant 0 : index
      %c0_11 = arith.constant 0 : index
      %c0_12 = arith.constant 0 : index
      %13 = vector.load %arg3[%c0_10, %c0_11, %c0_12] : memref<1x128x128xf32, #tpu.memory_space<vmem>>, vector<1x128x128xf32>
      %14 = vector.shape_cast %13 : vector<1x128x128xf32> to vector<128x128xf32>
      %15 = vector.shape_cast %12 : vector<128x128xf32> to vector<1x128x128xf32>
      tpu.vector_store %arg3[%c0_10, %c0_11, %c0_12], %15 {strides = array<i32>} : memref<1x128x128xf32, #tpu.memory_space<vmem>>, vector<1x128x128xf32>,
    } else {
    }
    %c0 = arith.constant 0 : index
    %c0_1 = arith.constant 0 : index
    %c0_2 = arith.constant 0 : index
    %3 = vector.load %arg2[%c0, %c0_1, %c0_2] : memref<1x128x256xf32, #tpu.memory_space<vmem>>, vector<1x128x256xf32>
    %4 = vector.shape_cast %3 : vector<1x128x256xf32> to vector<128x256xf32>
    %c0_3 = arith.constant 0 : index
    %c0_4 = arith.constant 0 : index
    %c0_5 = arith.constant 0 : index
    %5 = vector.load %arg3[%c0_3, %c0_4, %c0_5] : memref<1x128x128xf32, #tpu.memory_space<vmem>>, vector<1x128x128xf32>
    %6 = vector.shape_cast %5 : vector<1x128x128xf32> to vector<128x128xf32>
    %cst = arith.constant dense<0.000000e+00> : vector<128x128xf32>
    %7 = tpu.matmul %4, %4, %cst {dimension_numbers = #tpu.dot_dimension_numbers<[1], [1], [0], [0], [0, 0, 1, 0], [], []>} : vector<128x256xf32>, vector<128x256xf32>, vector<128x128xf32> -> vector<128x128xf32>
    %8 = arith.addf %6, %7 : vector<128x128xf32>
    %c0_6 = arith.constant 0 : index
    %c0_7 = arith.constant 0 : index
    %c0_8 = arith.constant 0 : index
    %9 = vector.load %arg3[%c0_6, %c0_7, %c0_8] : memref<1x128x128xf32, #tpu.memory_space<vmem>>, vector<1x128x128xf32>
    %10 = vector.shape_cast %9 : vector<1x128x128xf32> to vector<128x128xf32>
    %11 = vector.shape_cast %8 : vector<128x128xf32> to vector<1x128x128xf32>
    tpu.vector_store %arg3[%c0_6, %c0_7, %c0_8], %11 {strides = array<i32>} : memref<1x128x128xf32, #tpu.memory_space<vmem>>, vector<1x128x128xf32>,
    return
  }
  func.func @transform_0(%arg0: i32, %arg1: i32) -> (i32, i32, i32) {
    %c0_i32 = arith.constant 0 : i32
    %c0_i32_0 = arith.constant 0 : i32
    return %arg0, %c0_i32, %arg1 : i32, i32, i32
  }
  func.func @transform_1(%arg0: i32, %arg1: i32) -> (i32, i32, i32) {
    %c0_i32 = arith.constant 0 : i32
    %c0_i32_0 = arith.constant 0 : i32
    %c0_i32_1 = arith.constant 0 : i32
    return %arg0, %c0_i32, %c0_i32_0 : i32, i32, i32
  }
}

</mosaic_0001>

<llo_original>
// kernel: tpu_custom_call.1
$region0: #{tpu_custom_call.1}
  #allocation0 [shape = 'u32[]', space=smem, size = 0x4, offset = 0x4, fixed_abs, tag = 'smem constant byte address 0x4 - core index']
  #allocation1 [shape = 'u32[72,128]{1,0:T(1,128)}', space=vmem, size = 0x9000, scoped, tag = 'internal scratch']
  %s0 = inlined_call_operand.hbm [shape: f32[2,128,512], index: 0, kind: input, shape index: {}]
  %s1 = inlined_call_operand.hbm [shape: f32[2,128,128], index: 1, kind: output, shape index: {}]
  %s2 = sld [smem:[#allocation0]]
  $region45: #{tpu_custom_call.1} parent=0
    _
  %s4 = ssub.s32 1, %s2
  %s5 = scalar_select 0, %s4, %s2
  $region1: #{tpu_custom_call.1} parent=0
    #allocation2 [shape = 'u8[262144]{0}', space=vmem, size = 0x40000, scoped, tag = 'input window, operand 0']
    #allocation3 [shape = 's32[2]{0}', space=sflag, size = 0x8, scoped, tag = 'scoped memory for tpu_custom_call.1']
    #allocation4 [shape = 's32[2]{0}', space=sflag, size = 0x8, scoped, tag = 'scoped memory for tpu_custom_call.1']
    #allocation5 [shape = 'u8[131072]{0}', space=vmem, size = 0x20000, scoped, tag = 'output window, operand 0']
    %6 = vsyncpa [#allocation3], 0
    %s7 = scalar_lea.sflag [#allocation3], 1
    %8 = vsyncpa %s7, 0
    %9 = vsyncpa [#allocation4], 0
    %s10 = scalar_lea.sflag [#allocation4], 1
    %11 = vsyncpa %s10, 0
    loop: start=0, step=1, limit=6
    $region2: #{tpu_custom_call.1} parent=1 // loop_pre_header
      _
    $region3: #{tpu_custom_call.1} parent=1 // loop_header
      %s13 = sphi 0, %s17
      %p14 = scmp.ge.s32.totalorder %s13, 6
      %s20 = sphi 0, %s32
      %s21 = sphi 0, %s28
      %s22 = sphi 0, %s20
      %s23 = sphi 0, %s21
      %s24 = sphi 0, %s22
      %s25 = sphi 0, %s23
      %s37 = sphi 0, %s39
      %s40 = sphi 0, %s37
      %s41 = sphi 0, %s40
      %s57 = sphi 0, %s41
      %s63 = sphi 0, %s65
      %s66 = sphi 0, %s63
      %s67 = sphi 0, %s66
      %s83 = sphi 0, %s67
    $region4: #{tpu_custom_call.1} parent=1 // loop_header_branch
      %16 = sbr.rel (%p14) target = $region8
    $region5: #{tpu_custom_call.1} parent=1 // loop_body
      %s18 = ssub.s32 %s13, 1
      %s19 = ssub.s32 %s13, 2
      %s26 = sadd.s32 1, %s21
      %p27 = scmp.ge.s32.totalorder %s26, 2
      %s28 = scalar_select %p27, 0, %s26
      %s29 = sadd.s32 1, %s20
      %s30 = scalar_select %p27, %s29, %s20
      %p31 = scmp.ge.s32.totalorder %s30, 2
      %s32 = scalar_select %p31, 0, %s30
      %s33 = ssub.s32 %s20, %s32
      %s34 = ssub.s32 %s21, %s28
      %s35 = sor.u32 %s33, %s34
      %p36 = scmp.eq.s32.totalorder %s35, 0
      %s38 = sadd.s32 %s37, 1
      %s39 = scalar_select %p36, %s37, %s38
      %p42 = pneg %p36
      %p43 = scmp.eq.s32.totalorder %s13, 3
      %p44 = por %p42, %p43
      %p45 = scmp.ne.s32.totalorder %s37, %s40
      %p46 = scmp.eq.s32.totalorder %s13, 0
      %p47 = por %p45, %p46
      %p48 = scmp.ne.s32.totalorder %s37, %s40
      %p49 = scmp.eq.s32.totalorder %s18, 3
      %p50 = por %p48, %p49
      %p51 = scmp.ne.s32.totalorder %s40, %s41
      %p52 = scmp.eq.s32.totalorder %s18, 0
      %p53 = por %p51, %p52
      %p54 = scmp.ne.s32.totalorder %s40, %s41
      %p55 = scmp.eq.s32.totalorder %s19, 3
      %p56 = por %p54, %p55
      %p58 = scmp.ne.s32.totalorder %s41, %s57
      %p59 = scmp.eq.s32.totalorder %s19, 0
      %p60 = por %p58, %p59
      %s61 = ssub.s32 %s20, %s32
      %p62 = scmp.eq.s32.totalorder %s61, 0
      %s64 = sadd.s32 %s63, 1
      %s65 = scalar_select %p62, %s63, %s64
      %p68 = pneg %p62
      %p69 = scmp.eq.s32.totalorder %s13, 3
      %p70 = por %p68, %p69
      %p71 = scmp.ne.s32.totalorder %s63, %s66
      %p72 = scmp.eq.s32.totalorder %s13, 0
      %p73 = por %p71, %p72
      %p74 = scmp.ne.s32.totalorder %s63, %s66
      %p75 = scmp.eq.s32.totalorder %s18, 3
      %p76 = por %p74, %p75
      %p77 = scmp.ne.s32.totalorder %s66, %s67
      %p78 = scmp.eq.s32.totalorder %s18, 0
      %p79 = por %p77, %p78
      %p80 = scmp.ne.s32.totalorder %s66, %s67
      %p81 = scmp.eq.s32.totalorder %s19, 3
      %p82 = por %p80, %p81
      %p84 = scmp.ne.s32.totalorder %s67, %s83
      %p85 = scmp.eq.s32.totalorder %s19, 0
      %p86 = por %p84, %p85
      %p87 = scmp.le.s32.totalorder 1, %s13
      %p88 = scmp.lt.s32.totalorder %s13, 5
      %p89 = pnand %p87, %p88
      %p90 = pneg %p89
      // Predicated region
      $region9: #{tpu_custom_call.1} parent=5 // pred_check
        _
      $region10: #{tpu_custom_call.1} parent=5 // pred_check_branch
        %92 = sbr.rel (%p89) target = $region12
      $region11: #{tpu_custom_call.1} parent=5 // pred_region
        %s93 = ssub.s32 %s13, 1
      $region12: #{tpu_custom_call.1} parent=5 // pred_fallthru
        _
      %p94 = scmp.lt.s32.totalorder %s13, 4
      // Predicated region
      $region13: #{tpu_custom_call.1} parent=5 // pred_check
        %p95 = pneg %p94
      $region14: #{tpu_custom_call.1} parent=5 // pred_check_branch
        %97 = sbr.rel (%p95) target = $region16
      $region15: #{tpu_custom_call.1} parent=5 // pred_region
        // Predicated region
        $region17: #{tpu_custom_call.1} parent=15 // pred_check
          %p98 = pneg %p47
        $region18: #{tpu_custom_call.1} parent=15 // pred_check_branch
          %100 = sbr.rel (%p98) target = $region20
        $region19: #{tpu_custom_call.1} parent=15 // pred_region
          %s101 = sand.u32 %s37, 1
          %s102 = scalar_lea.sflag [#allocation3], %s101
          %s103 = sand.u32 %s37, 1
          %s104 = smul.addr %s103, 256
          %s105 = scalar_lea.vmem [#allocation2], %s104
          %s106 = smul.u32 2, %s21
          %108 = vsyncadd %s102, 0
          %s109 = smul.addr %s20, 64
          %s110 = sadd.s32 %s106, %s109
          %s111 = smul.addr %s110, 8
          %s112 = scalar_lea.hbm %s0, %s111
          %s113 = sshll.u32 %s112, 4
          %s114 = int_to_ptr.hbm [resolvable:$true] %s113
          %s115 = sshll.u32 %s105, 4
          %s116 = int_to_ptr.vmem [resolvable:$true] %s115
          %121 = dma.hbm_to_vmem [thread:$0]  %s114, 4096, %s116, %s102, 512, 256, 16
        $region20: #{tpu_custom_call.1} parent=15 // pred_fallthru
          _
      $region16: #{tpu_custom_call.1} parent=5 // pred_fallthru
        _
      %p122 = scmp.le.s32.totalorder 1, %s13
      %p123 = scmp.lt.s32.totalorder %s13, 5
      %p124 = pnand %p122, %p123
      %p125 = pneg %p124
      // Predicated region
      $region21: #{tpu_custom_call.1} parent=5 // pred_check
        _
      $region22: #{tpu_custom_call.1} parent=5 // pred_check_branch
        %127 = sbr.rel (%p124) target = $region24
      $region23: #{tpu_custom_call.1} parent=5 // pred_region
        %s128 = ssub.s32 %s13, 1
        %s129 = sand.u32 %s40, 1
        %s130 = scalar_lea.sflag [#allocation3], %s129
        %s131 = sand.u32 %s40, 1
        %s132 = smul.addr %s131, 256
        %s133 = scalar_lea.vmem [#allocation2], %s132
        // Predicated region
        $region25: #{tpu_custom_call.1} parent=23 // pred_check
          %p134 = pneg %p53
        $region26: #{tpu_custom_call.1} parent=23 // pred_check_branch
          %136 = sbr.rel (%p134) target = $region28
        $region27: #{tpu_custom_call.1} parent=23 // pred_region
          %138 = dma.done %s130, 4096
        $region28: #{tpu_custom_call.1} parent=23 // pred_fallthru
          _
        %s139 = sand.u32 %s40, 1
        %s140 = scalar_lea.sflag [#allocation3], %s139
        %s141 = sand.u32 %s40, 1
        %s142 = smul.addr %s141, 256
        %s143 = scalar_lea.vmem [#allocation2], %s142
        %p144 = pneg %p53
        %p145 = pneg %p50
        %p146 = pneg %p79
        %p147 = pneg %p76
        %s148 = sand.u32 %s66, 1
        %s149 = scalar_lea.sflag [#allocation4], %s148
        %s150 = sand.u32 %s66, 1
        %s151 = smul.addr %s150, 128
        %s152 = scalar_lea.vmem [#allocation5], %s151
        %s153 = smul.u32 2, %s23
        %p154 = scmp.eq.s32.totalorder %s23, 0
        // Predicated region
        $region29: #{tpu_custom_call.1} parent=23 // pred_check
          %p155 = pneg %p154
        $region30: #{tpu_custom_call.1} parent=23 // pred_check_branch
          %157 = sbr.rel (%p155) target = $region32
        $region31: #{tpu_custom_call.1} parent=23 // pred_region
          %158 = vst [vmem:[%s152] sm:$0xff] 0.0
          %159 = vst [vmem:[%s152 + $0x8] sm:$0xff] 0.0
          %160 = vst [vmem:[%s152 + $0x10] sm:$0xff] 0.0
          %161 = vst [vmem:[%s152 + $0x18] sm:$0xff] 0.0
          %162 = vst [vmem:[%s152 + $0x20] sm:$0xff] 0.0
          %163 = vst [vmem:[%s152 + $0x28] sm:$0xff] 0.0
          %164 = vst [vmem:[%s152 + $0x30] sm:$0xff] 0.0
          %165 = vst [vmem:[%s152 + $0x38] sm:$0xff] 0.0
          %166 = vst [vmem:[%s152 + $0x40] sm:$0xff] 0.0
          %167 = vst [vmem:[%s152 + $0x48] sm:$0xff] 0.0
          %168 = vst [vmem:[%s152 + $0x50] sm:$0xff] 0.0
          %169 = vst [vmem:[%s152 + $0x58] sm:$0xff] 0.0
          %170 = vst [vmem:[%s152 + $0x60] sm:$0xff] 0.0
          %171 = vst [vmem:[%s152 + $0x68] sm:$0xff] 0.0
          %172 = vst [vmem:[%s152 + $0x70] sm:$0xff] 0.0
          %173 = vst [vmem:[%s152 + $0x78] sm:$0xff] 0.0
        $region32: #{tpu_custom_call.1} parent=23 // pred_fallthru
          _
        %v174 = vld [vmem:[%s133] sm:$0xff]
        %v175 = vld [vmem:[%s133 + $0x8] sm:$0xff]
        %v176 = vld [vmem:[%s133 + $0x10] sm:$0xff]
        %v177 = vld [vmem:[%s133 + $0x18] sm:$0xff]
        %v178 = vld [vmem:[%s133 + $0x20] sm:$0xff]
        %v179 = vld [vmem:[%s133 + $0x28] sm:$0xff]
        %v180 = vld [vmem:[%s133 + $0x30] sm:$0xff]
        %v181 = vld [vmem:[%s133 + $0x38] sm:$0xff]
        %v182 = vld [vmem:[%s133 + $0x40] sm:$0xff]
        %v183 = vld [vmem:[%s133 + $0x48] sm:$0xff]
        %v184 = vld [vmem:[%s133 + $0x50] sm:$0xff]
        %v185 = vld [vmem:[%s133 + $0x58] sm:$0xff]
        %v186 = vld [vmem:[%s133 + $0x60] sm:$0xff]
        %v187 = vld [vmem:[%s133 + $0x68] sm:$0xff]
        %v188 = vld [vmem:[%s133 + $0x70] sm:$0xff]
        %v189 = vld [vmem:[%s133 + $0x78] sm:$0xff]
        %v190 = vld [vmem:[%s133 + $0x80] sm:$0xff]
        %v191 = vld [vmem:[%s133 + $0x88] sm:$0xff]
        %v192 = vld [vmem:[%s133 + $0x90] sm:$0xff]
        %v193 = vld [vmem:[%s133 + $0x98] sm:$0xff]
        %v194 = vld [vmem:[%s133 + $0xa0] sm:$0xff]
        %v195 = vld [vmem:[%s133 + $0xa8] sm:$0xff]
        %v196 = vld [vmem:[%s133 + $0xb0] sm:$0xff]
        %v197 = vld [vmem:[%s133 + $0xb8] sm:$0xff]
        %v198 = vld [vmem:[%s133 + $0xc0] sm:$0xff]
        %v199 = vld [vmem:[%s133 + $0xc8] sm:$0xff]
        %v200 = vld [vmem:[%s133 + $0xd0] sm:$0xff]
        %v201 = vld [vmem:[%s133 + $0xd8] sm:$0xff]
        %v202 = vld [vmem:[%s133 + $0xe0] sm:$0xff]
        %v203 = vld [vmem:[%s133 + $0xe8] sm:$0xff]
        %v204 = vld [vmem:[%s133 + $0xf0] sm:$0xff]
        %v205 = vld [vmem:[%s133 + $0xf8] sm:$0xff]
        %v206 = vld [vmem:[%s152] sm:$0xff]
        %v207 = vld [vmem:[%s152 + $0x8] sm:$0xff]
        %v208 = vld [vmem:[%s152 + $0x10] sm:$0xff]
        %v209 = vld [vmem:[%s152 + $0x18] sm:$0xff]
        %v210 = vld [vmem:[%s152 + $0x20] sm:$0xff]
        %v211 = vld [vmem:[%s152 + $0x28] sm:$0xff]
        %v212 = vld [vmem:[%s152 + $0x30] sm:$0xff]
        %v213 = vld [vmem:[%s152 + $0x38] sm:$0xff]
        %v214 = vld [vmem:[%s152 + $0x40] sm:$0xff]
        %v215 = vld [vmem:[%s152 + $0x48] sm:$0xff]
        %v216 = vld [vmem:[%s152 + $0x50] sm:$0xff]
        %v217 = vld [vmem:[%s152 + $0x58] sm:$0xff]
        %v218 = vld [vmem:[%s152 + $0x60] sm:$0xff]
        %v219 = vld [vmem:[%s152 + $0x68] sm:$0xff]
        %v220 = vld [vmem:[%s152 + $0x70] sm:$0xff]
        %v221 = vld [vmem:[%s152 + $0x78] sm:$0xff]
        %222 = vmatpush.xpose.msra.mxu0 %v204
        %223 = vmatpush.xpose.msra.mxu0 %v202
        %224 = vmatpush.xpose.msra.mxu0 %v200
        %225 = vmatpush.xpose.msra.mxu0 %v198
        %226 = vmatpush.xpose.msra.mxu0 %v196
        %227 = vmatpush.xpose.msra.mxu0 %v194
        %228 = vmatpush.xpose.msra.mxu0 %v192
        %229 = vmatpush.xpose.msra.mxu0 %v190
        %230 = vmatpush.xpose.msra.mxu0 %v188
        %231 = vmatpush.xpose.msra.mxu0 %v186
        %232 = vmatpush.xpose.msra.mxu0 %v184
        %233 = vmatpush.xpose.msra.mxu0 %v182
        %234 = vmatpush.xpose.msra.mxu0 %v180
        %235 = vmatpush.xpose.msra.mxu0 %v178
        %236 = vmatpush.xpose.msra.mxu0 %v176
        %237 = vmatpush.xpose.msra.mxu0 %v174
        %238 = vmatmul.f32.gmra.mxu0 %v174
        %v239 = vpop.f32.mrf.mxu0
        %v240 = vadd.f32 0.0, %v239
        %241 = vmatmul.f32.gmra.mxu0 %v176
        %v242 = vpop.f32.mrf.mxu0
        %v243 = vadd.f32 0.0, %v242
        %244 = vmatmul.f32.gmra.mxu0 %v178
        %v245 = vpop.f32.mrf.mxu0
        %v246 = vadd.f32 0.0, %v245
        %247 = vmatmul.f32.gmra.mxu0 %v180
        %v248 = vpop.f32.mrf.mxu0
        %v249 = vadd.f32 0.0, %v248
        %250 = vmatmul.f32.gmra.mxu0 %v182
        %v251 = vpop.f32.mrf.mxu0
        %v252 = vadd.f32 0.0, %v251
        %253 = vmatmul.f32.gmra.mxu0 %v184
        %v254 = vpop.f32.mrf.mxu0
        %v255 = vadd.f32 0.0, %v254
        %256 = vmatmul.f32.gmra.mxu0 %v186
        %v257 = vpop.f32.mrf.mxu0
        %v258 = vadd.f32 0.0, %v257
        %259 = vmatmul.f32.gmra.mxu0 %v188
        %v260 = vpop.f32.mrf.mxu0
        %v261 = vadd.f32 0.0, %v260
        %262 = vmatmul.f32.gmra.mxu0 %v190
        %v263 = vpop.f32.mrf.mxu0
        %v264 = vadd.f32 0.0, %v263
        %265 = vmatmul.f32.gmra.mxu0 %v192
        %v266 = vpop.f32.mrf.mxu0
        %v267 = vadd.f32 0.0, %v266
        %268 = vmatmul.f32.gmra.mxu0 %v194
        %v269 = vpop.f32.mrf.mxu0
        %v270 = vadd.f32 0.0, %v269
        %271 = vmatmul.f32.gmra.mxu0 %v196
        %v272 = vpop.f32.mrf.mxu0
        %v273 = vadd.f32 0.0, %v272
        %274 = vmatmul.f32.gmra.mxu0 %v198
        %v275 = vpop.f32.mrf.mxu0
        %v276 = vadd.f32 0.0, %v275
        %277 = vmatmul.f32.gmra.mxu0 %v200
        %v278 = vpop.f32.mrf.mxu0
        %v279 = vadd.f32 0.0, %v278
        %280 = vmatmul.f32.gmra.mxu0 %v202
        %v281 = vpop.f32.mrf.mxu0
        %v282 = vadd.f32 0.0, %v281
        %283 = vmatmul.f32.gmra.mxu0 %v204
        %v284 = vpop.f32.mrf.mxu0
        %v285 = vadd.f32 0.0, %v284
        %286 = vdwg.mxu0
        %287 = vmatpush.xpose.msra.mxu0 %v205
        %288 = vmatpush.xpose.msra.mxu0 %v203
        %289 = vmatpush.xpose.msra.mxu0 %v201
        %290 = vmatpush.xpose.msra.mxu0 %v199
        %291 = vmatpush.xpose.msra.mxu0 %v197
        %292 = vmatpush.xpose.msra.mxu0 %v195
        %293 = vmatpush.xpose.msra.mxu0 %v193
        %294 = vmatpush.xpose.msra.mxu0 %v191
        %295 = vmatpush.xpose.msra.mxu0 %v189
        %296 = vmatpush.xpose.msra.mxu0 %v187
        %297 = vmatpush.xpose.msra.mxu0 %v185
        %298 = vmatpush.xpose.msra.mxu0 %v183
        %299 = vmatpush.xpose.msra.mxu0 %v181
        %300 = vmatpush.xpose.msra.mxu0 %v179
        %301 = vmatpush.xpose.msra.mxu0 %v177
        %302 = vmatpush.xpose.msra.mxu0 %v175
        %303 = vmatmul.f32.gmra.mxu0 %v175
        %v304 = vpop.f32.mrf.mxu0
        %v305 = vadd.f32 %v240, %v304
        %306 = vmatmul.f32.gmra.mxu0 %v177
        %v307 = vpop.f32.mrf.mxu0
        %v308 = vadd.f32 %v243, %v307
        %309 = vmatmul.f32.gmra.mxu0 %v179
        %v310 = vpop.f32.mrf.mxu0
        %v311 = vadd.f32 %v246, %v310
        %312 = vmatmul.f32.gmra.mxu0 %v181
        %v313 = vpop.f32.mrf.mxu0
        %v314 = vadd.f32 %v249, %v313
        %315 = vmatmul.f32.gmra.mxu0 %v183
        %v316 = vpop.f32.mrf.mxu0
        %v317 = vadd.f32 %v252, %v316
        %318 = vmatmul.f32.gmra.mxu0 %v185
        %v319 = vpop.f32.mrf.mxu0
        %v320 = vadd.f32 %v255, %v319
        %321 = vmatmul.f32.gmra.mxu0 %v187
        %v322 = vpop.f32.mrf.mxu0
        %v323 = vadd.f32 %v258, %v322
        %324 = vmatmul.f32.gmra.mxu0 %v189
        %v325 = vpop.f32.mrf.mxu0
        %v326 = vadd.f32 %v261, %v325
        %327 = vmatmul.f32.gmra.mxu0 %v191
        %v328 = vpop.f32.mrf.mxu0
        %v329 = vadd.f32 %v264, %v328
        %330 = vmatmul.f32.gmra.mxu0 %v193
        %v331 = vpop.f32.mrf.mxu0
        %v332 = vadd.f32 %v267, %v331
        %333 = vmatmul.f32.gmra.mxu0 %v195
        %v334 = vpop.f32.mrf.mxu0
        %v335 = vadd.f32 %v270, %v334
        %336 = vmatmul.f32.gmra.mxu0 %v197
        %v337 = vpop.f32.mrf.mxu0
        %v338 = vadd.f32 %v273, %v337
        %339 = vmatmul.f32.gmra.mxu0 %v199
        %v340 = vpop.f32.mrf.mxu0
        %v341 = vadd.f32 %v276, %v340
        %342 = vmatmul.f32.gmra.mxu0 %v201
        %v343 = vpop.f32.mrf.mxu0
        %v344 = vadd.f32 %v279, %v343
        %345 = vmatmul.f32.gmra.mxu0 %v203
        %v346 = vpop.f32.mrf.mxu0
        %v347 = vadd.f32 %v282, %v346
        %348 = vmatmul.f32.gmra.mxu0 %v205
        %v349 = vpop.f32.mrf.mxu0
        %v350 = vadd.f32 %v285, %v349
        %351 = vdwg.mxu0
        %v352 = vadd.f32 %v206, %v305
        %v353 = vadd.f32 %v207, %v308
        %v354 = vadd.f32 %v208, %v311
        %v355 = vadd.f32 %v209, %v314
        %v356 = vadd.f32 %v210, %v317
        %v357 = vadd.f32 %v211, %v320
        %v358 = vadd.f32 %v212, %v323
        %v359 = vadd.f32 %v213, %v326
        %v360 = vadd.f32 %v214, %v329
        %v361 = vadd.f32 %v215, %v332
        %v362 = vadd.f32 %v216, %v335
        %v363 = vadd.f32 %v217, %v338
        %v364 = vadd.f32 %v218, %v341
        %v365 = vadd.f32 %v219, %v344
        %v366 = vadd.f32 %v220, %v347
        %v367 = vadd.f32 %v221, %v350
        %368 = vst [vmem:[%s152] sm:$0xff] %v352
        %369 = vst [vmem:[%s152 + $0x8] sm:$0xff] %v353
        %370 = vst [vmem:[%s152 + $0x10] sm:$0xff] %v354
        %371 = vst [vmem:[%s152 + $0x18] sm:$0xff] %v355
        %372 = vst [vmem:[%s152 + $0x20] sm:$0xff] %v356
        %373 = vst [vmem:[%s152 + $0x28] sm:$0xff] %v357
        %374 = vst [vmem:[%s152 + $0x30] sm:$0xff] %v358
        %375 = vst [vmem:[%s152 + $0x38] sm:$0xff] %v359
        %376 = vst [vmem:[%s152 + $0x40] sm:$0xff] %v360
        %377 = vst [vmem:[%s152 + $0x48] sm:$0xff] %v361
        %378 = vst [vmem:[%s152 + $0x50] sm:$0xff] %v362
        %379 = vst [vmem:[%s152 + $0x58] sm:$0xff] %v363
        %380 = vst [vmem:[%s152 + $0x60] sm:$0xff] %v364
        %381 = vst [vmem:[%s152 + $0x68] sm:$0xff] %v365
        %382 = vst [vmem:[%s152 + $0x70] sm:$0xff] %v366
        %383 = vst [vmem:[%s152 + $0x78] sm:$0xff] %v367
        %s384 = sand.u32 %s66, 1
        %s385 = scalar_lea.sflag [#allocation4], %s384
        %s386 = sand.u32 %s66, 1
        %s387 = smul.addr %s386, 128
        %s388 = scalar_lea.vmem [#allocation5], %s387
        // Predicated region
        $region33: #{tpu_custom_call.1} parent=23 // pred_check
          %p389 = pneg %p76
        $region34: #{tpu_custom_call.1} parent=23 // pred_check_branch
          %391 = sbr.rel (%p389) target = $region36
        $region35: #{tpu_custom_call.1} parent=23 // pred_region
          %393 = vsyncadd %s385, 0
          %s394 = smul.addr %s22, 16
          %s395 = smul.addr %s394, 8
          %s396 = scalar_lea.hbm %s1, %s395
          %s397 = sshll.u32 %s388, 4
          %s398 = int_to_ptr.vmem [resolvable:$true] %s397
          %s399 = sshll.u32 %s396, 4
          %s400 = int_to_ptr.hbm [resolvable:$true] %s399
          %405 = dma.vmem_to_hbm [thread:$0]  %s398, 2048, %s400, %s385, 128, 128, 8
        $region36: #{tpu_custom_call.1} parent=23 // pred_fallthru
          _
      $region24: #{tpu_custom_call.1} parent=5 // pred_fallthru
        _
      %p406 = scmp.le.s32.totalorder 2, %s13
      // Predicated region
      $region37: #{tpu_custom_call.1} parent=5 // pred_check
        %p407 = pneg %p406
      $region38: #{tpu_custom_call.1} parent=5 // pred_check_branch
        %409 = sbr.rel (%p407) target = $region40
      $region39: #{tpu_custom_call.1} parent=5 // pred_region
        %s410 = ssub.s32 %s13, 2
        // Predicated region
        $region41: #{tpu_custom_call.1} parent=39 // pred_check
          %p411 = pneg %p82
        $region42: #{tpu_custom_call.1} parent=39 // pred_check_branch
          %413 = sbr.rel (%p411) target = $region44
        $region43: #{tpu_custom_call.1} parent=39 // pred_region
          %s414 = sand.u32 %s67, 1
          %s415 = scalar_lea.sflag [#allocation4], %s414
          %s416 = sand.u32 %s67, 1
          %s417 = smul.addr %s416, 128
          %s418 = scalar_lea.vmem [#allocation5], %s417
          %420 = dma.done %s415, 2048
        $region44: #{tpu_custom_call.1} parent=39 // pred_fallthru
          _
      $region40: #{tpu_custom_call.1} parent=5 // pred_fallthru
        _
    $region6: #{tpu_custom_call.1} parent=1 // loop_footer
      %s17 = sadd.s32 1, %s13
    $region7: #{tpu_custom_call.1} parent=1 // loop_footer_branch
      %12 = sbr.rel target = $region3
    $region8: #{tpu_custom_call.1} parent=1 // loop_exit
      _
    %421 = vsyncpa [#allocation3], 1
    %s422 = scalar_lea.sflag [#allocation3], 1
    %423 = vsyncpa %s422, 1
    %424 = vsyncpa [#allocation4], 1
    %s425 = scalar_lea.sflag [#allocation4], 1
    %426 = vsyncpa %s425, 1

</llo_original>
